<compile_context>
chip_gen: v5e
topology: v5e:2x2
jax: 0.10.0
libtpu: 0.0.40
codegen_flags: <defaults>
</compile_context>

<pallas_src>
import functools
import time

import jax
import jax.numpy as jnp
from jax import lax
from jax.experimental import pallas as pl
from jax.experimental.pallas import tpu as pltpu

_LANE = 128


def _round_up(x, m):
    return ((x + m - 1) // m) * m


def _pick_tile(dim, max_tile, align):
    """Largest multiple of `align` <= max_tile that divides `dim` (dim % align == 0)."""
    t = min(max_tile, dim)
    t = (t // align) * align
    while t > align and dim % t != 0:
        t -= align
    return max(t, align)


@functools.lru_cache(maxsize=None)
def _vmem_budget_bytes():
    """Per-generation scoped-VMEM budget: ~3/4 of physical VMEM, capped at 96 MiB.

    v7x (64 MiB physical) -> 48 MiB; v5e/v6e (128 MiB physical) -> 96 MiB.
    Falls back to a conservative 48 MiB budget if the hardware query fails.
    """
    cap = 64 * 1024 * 1024
    try:
        cap = int(getattr(pltpu.get_tpu_info(), "vmem_capacity_bytes", cap))
    except Exception:
        pass
    return max(32 * 1024 * 1024, min((cap * 3) // 4, 96 * 1024 * 1024))


# ----------------------------- linear kernels ---------------------------------
def _linear_acc_kernel(*refs, has_bias, apply_relu):
    """K-tiled matmul: grid=(M/tm, N/tn, K/tk); f32 accumulator resident in VMEM."""
    if has_bias:
        x_ref, w_ref, b_ref, o_ref, acc_ref = refs
    else:
        x_ref, w_ref, o_ref, acc_ref = refs
        b_ref = None
    k = pl.program_id(2)

    @pl.when(k == 0)
    def _init():
        acc_ref[...] = jnp.zeros_like(acc_ref)

    # Contract the K (lane) axis of both operands: x:(tm,tk) . w:(tn,tk) -> (tm,tn).
    # The MXU consumes the RHS transposed; no wrapper-side weight.T HBM pass.
    acc_ref[...] += lax.dot_general(
        x_ref[...],
        w_ref[...],
        dimension_numbers=(((1,), (1,)), ((), ())),
        preferred_element_type=jnp.float32,
    )

    @pl.when(k == pl.num_programs(2) - 1)
    def _finalize():
        acc = acc_ref[...]
        if has_bias:
            acc = acc + b_ref[...].astype(jnp.float32)
        if apply_relu:
            acc = jnp.maximum(acc, 0.0)
        o_ref[...] = acc.astype(o_ref.dtype)


def _linear_onek_kernel(*refs, has_bias, apply_relu):
    """Whole contraction in a single K tile: no accumulator scratch round-trip."""
    if has_bias:
        x_ref, w_ref, b_ref, o_ref = refs
    else:
        x_ref, w_ref, o_ref = refs
        b_ref = None
    acc = lax.dot_general(
        x_ref[...],
        w_ref[...],
        dimension_numbers=(((1,), (1,)), ((), ())),
        preferred_element_type=jnp.float32,
    )
    if has_bias:
        acc = acc + b_ref[...].astype(jnp.float32)
    if apply_relu:
        acc = jnp.maximum(acc, 0.0)
    o_ref[...] = acc.astype(o_ref.dtype)


def pallas_linear(x, weight, bias=None, *, compute_dtype="auto", activation=None,
                  tk_max=2048):
    """Equivalent of torch.nn.functional.linear(x, weight, bias).

    x:      [..., K]
    weight: [N, K]   (PyTorch convention; never transposed in the wrapper)
    bias:   [N] or None (None skips the bias DMA entirely)
    compute_dtype: "auto" (default) runs the MXU in bf16 with f32 accumulation
      when the input is f32; pass None for the exact input-dtype path or an
      explicit dtype.
    activation: None or "relu" (fused epilogue in the finalize step).
    """
    orig_shape = x.shape
    K = orig_shape[-1]
    N = weight.shape[0]
    out_dtype = x.dtype

    x2d = x.reshape(-1, K)
    M = x2d.shape[0]

    if compute_dtype == "auto":
        compute_dtype = jnp.bfloat16 if x2d.dtype == jnp.float32 else None
    if compute_dtype is not None:
        x2d = x2d.astype(compute_dtype)
        weight = weight.astype(compute_dtype)
    elif weight.dtype != x2d.dtype:
        weight = weight.astype(x2d.dtype)

    in_itemsize = x2d.dtype.itemsize
    out_itemsize = jnp.dtype(out_dtype).itemsize
    budget = _vmem_budget_bytes()

    # K must be a full-lane multiple for an exact contraction; zero-pad only when
    # ragged (zero-padding the contraction axis is exact).
    Kp = _round_up(K, _LANE)
    if Kp != K:
        x2d = jnp.pad(x2d, ((0, 0), (0, Kp - K)))
        weight = jnp.pad(weight, ((0, 0), (0, Kp - K)))

    # N axis: keep small ragged N un-padded (full-dim output block -> no pad pass
    # over the weight and no output slice pass); only very large ragged N is padded.
    # TODO(synk): F.linear receives the weight on every call, so a padded or
    # pre-transposed weight cannot be cached across calls here.
    slice_n = False
    if N % _LANE == 0 or N <= 4096:
        Np = N
    else:
        Np = _round_up(N, _LANE)
        weight = jnp.pad(weight, ((0, Np - N), (0, 0)))
        slice_n = True

    has_bias = bias is not None
    if has_bias:
        b2d = bias.reshape(1, N)
        if slice_n:
            b2d = jnp.pad(b2d, ((0, 0), (0, Np - N)))

    # ---- tile selection (per-generation VMEM-budget aware) ----
    tm = M if M <= 512 else 512
    tn = _pick_tile(Np, 512, _LANE) if Np % _LANE == 0 else Np
    tk = _pick_tile(Kp, tk_max, _LANE)

    def _footprint(tm_, tn_, tk_):
        return (2 * tm_ * tk_ * in_itemsize           # x blocks (double-buffered)
                + 2 * tn_ * tk_ * in_itemsize         # weight blocks
                + 2 * tm_ * tn_ * out_itemsize        # output blocks
                + (2 * tn_ * 4 if has_bias else 0)    # bias blocks
                + tm_ * tn_ * 4)                      # f32 accumulator scratch

    while _footprint(tm, tn, tk) > budget and tk > _LANE:
        tk = _pick_tile(Kp, tk // 2, _LANE)
    while _footprint(tm, tn, tk) > budget and tm > 8:
        tm = max(8, ((tm // 2) // 8) * 8)

    # Guarantee >=2 blocks on the parallel axes for megacore (v7x: 2 TCs/chip)
    # when there is enough work to split.
    n_i, n_j = pl.cdiv(M, tm), pl.cdiv(Np, tn)
    if n_i * n_j < 2:
        if M > 128:
            tm = _round_up(-(-M // 2), 8)
        elif Np % _LANE == 0 and tn % 256 == 0:
            tn = tn // 2
        n_i, n_j = pl.cdiv(M, tm), pl.cdiv(Np, tn)

    nk = Kp // tk
    apply_relu = (activation == "relu")

    if nk == 1:
        kernel = functools.partial(_linear_onek_kernel, has_bias=has_bias,
                                   apply_relu=apply_relu)
        grid = (n_i, n_j)
        in_specs = [pl.BlockSpec((tm, tk), lambda i, j: (i, 0)),
                    pl.BlockSpec((tn, tk), lambda i, j: (j, 0))]
        if has_bias:
            in_specs.append(pl.BlockSpec((1, tn), lambda i, j: (0, j)))
        out_spec = pl.BlockSpec((tm, tn), lambda i, j: (i, j))
        scratch = []
        semantics = ("parallel", "parallel")
    else:
        kernel = functools.partial(_linear_acc_kernel, has_bias=has_bias,
                                   apply_relu=apply_relu)
        grid = (n_i, n_j, nk)
        in_specs = [pl.BlockSpec((tm, tk), lambda i, j, k: (i, k)),
                    pl.BlockSpec((tn, tk), lambda i, j, k: (j, k))]
        if has_bias:
            in_specs.append(pl.BlockSpec((1, tn), lambda i, j, k: (0, j)))
        out_spec = pl.BlockSpec((tm, tn), lambda i, j, k: (i, j))
        scratch = [pltpu.VMEM((tm, tn), jnp.float32)]
        semantics = ("parallel", "parallel", "arbitrary")

    args = [x2d, weight] + ([b2d] if has_bias else [])

    out = pl.pallas_call(
        kernel,
        out_shape=jax.ShapeDtypeStruct((M, Np), out_dtype),
        grid=grid,
        in_specs=in_specs,
        out_specs=out_spec,
        scratch_shapes=scratch,
        compiler_params=pltpu.CompilerParams(
            dimension_semantics=semantics,
            vmem_limit_bytes=budget,
        ),
    )(*args)

    if slice_n:
        out = out[:, :N]
    return out.reshape(*orig_shape[:-1], N)


# ------------------------------ relu kernel ----------------------------------
def _relu_kernel(x_ref, o_ref):
    x = x_ref[...]
    o_ref[...] = jnp.maximum(x, jnp.zeros_like(x))


def pallas_relu(x):
    """Equivalent of torch.nn.functional.relu(x).

    Pure HBM-bandwidth op: single read + single write, 2-D lane-dense cdiv grid
    (no flatten/pad pass for ragged shapes; OOB cells of the edge blocks are
    read as garbage but never written back).
    """
    if x.size == 0:
        return x
    orig_shape = x.shape
    if x.ndim >= 2:
        cols = orig_shape[-1]
        x2d = x.reshape(-1, cols)
    else:
        cols = x.size
        x2d = x.reshape(1, cols)
    rows, cols = x2d.shape
    itemsize = x2d.dtype.itemsize
    budget = _vmem_budget_bytes()
    # ~8 MiB blocks (in + out, double-buffered -> ~4x block bytes, well under budget).
    block_bytes = max(1 << 20, min(8 << 20, budget // 6))

    if cols * itemsize <= block_bytes:
        tc = cols                                    # full width, lane-dense, no col grid
    else:
        tc = max(_LANE, (block_bytes // (8 * itemsize)) // _LANE * _LANE)
        tc = min(tc, _round_up(cols, _LANE))
    max_rows = max(8, (block_bytes // max(tc * itemsize, 1)) // 8 * 8)
    tr = rows if rows <= max_rows else max_rows

    grid = (pl.cdiv(rows, tr), pl.cdiv(cols, tc))
    out = pl.pallas_call(
        _relu_kernel,
        out_shape=jax.ShapeDtypeStruct((rows, cols), x2d.dtype),
        grid=grid,
        in_specs=[pl.BlockSpec((tr, tc), lambda i, j: (i, j))],
        out_specs=pl.BlockSpec((tr, tc), lambda i, j: (i, j)),
        compiler_params=pltpu.CompilerParams(
            dimension_semantics=("parallel", "parallel"),
            vmem_limit_bytes=budget,
        ),
    )(x2d)
    return out.reshape(orig_shape)


# ------------------------- FunctionalOPTemplate port --------------------------
class FunctionalOPTemplate:
    """JAX/Pallas port of the PyTorch dispatch-and-time wrapper.

    forward(*args, **kwargs) dispatches the named functional op to its Pallas
    kernel implementation, optionally timing it (mirrors the original module's
    behaviour).  Note: the printed cost_time includes trace/compile on the first
    call and is not a valid device-performance signal (use an xprof trace).
    """

    _OP_REGISTRY = {
        "torch.nn.functional.linear": pallas_linear,
        "torch.nn.functional.relu": pallas_relu,
    }

    def __init__(self, op_name, hook_inside=False, parall_execute=False):
        self.op_name_ = op_name
        self.prefix_op_name_ = "Functional_" + str(op_name) + "_"
        self.changed_status = hook_inside
        self.parall_execute = parall_execute
        # TODO(synk): global_param.g_stop_hook bookkeeping of the original module
        # is host-side framework state with no device-side equivalent.

    def _dispatch(self, *args, **kwargs):
        fn = self._OP_REGISTRY.get(self.op_name_)
        if fn is None:
            # TODO(synk): only linear/relu have Pallas kernels here; other
            # functional ops of the generic eval() template are not implemented.
            raise NotImplementedError(self.op_name_)
        return fn(*args, **kwargs)

    def forward(self, *args, **kwargs):
        if self.changed_status:
            try:
                start_time = time.perf_counter()
                out = self._dispatch(*args, **kwargs)
                if not self.parall_execute:
                    jax.block_until_ready(out)   # analogue of cuda.synchronize()
                end_time = time.perf_counter()
                print(f"pallas.{self.op_name_} cost_time:{end_time - start_time}")
            finally:
                self.changed_status = False
        else:
            out = self._dispatch(*args, **kwargs)
        return out

    __call__ = forward


# ----------------------------------- main -------------------------------------
if __name__ == "__main__":
    key = jax.random.PRNGKey(0)
    kx, kw, kb, kx2, kw2, kx3, kw3, kb3 = jax.random.split(key, 8)

    # Small shapes implied by a typical functional op: batch=2, seq=8, hidden=32.
    B, S, K, N = 2, 8, 32, 64
    x = jax.random.normal(kx, (B, S, K), dtype=jnp.float32)
    weight = jax.random.normal(kw, (N, K), dtype=jnp.float32) * 0.1  # PyTorch [out, in]
    bias = jax.random.normal(kb, (N,), dtype=jnp.float32) * 0.1
    y_ref = x @ weight.T + bias

    # linear via the dispatcher (default bf16 MXU compute, f32 accumulation)
    linear_op = FunctionalOPTemplate("torch.nn.functional.linear", hook_inside=True)
    y = linear_op(x, weight, bias)
    jax.block_until_ready(y)
    assert y.shape == (B, S, N)
    assert jnp.allclose(y, y_ref, atol=3e-2, rtol=3e-2)        # bf16-compute tolerance

    # explicit f32 opt-out path: exact against the f32 reference
    y32 = pallas_linear(x, weight, bias, compute_dtype=None)
    jax.block_until_ready(y32)
    assert jnp.allclose(y32, y_ref, atol=1e-4, rtol=1e-4)

    # aligned-N, no-bias path (lane-dense tiled j axis, no bias DMA)
    K2, N2 = 128, 256
    x2 = jax.random.normal(kx2, (B, S, K2), dtype=jnp.float32)
    w2 = jax.random.normal(kw2, (N2, K2), dtype=jnp.float32) * 0.05
    y2 = pallas_linear(x2, w2)
    jax.block_until_ready(y2)
    assert jnp.allclose(y2, x2 @ w2.T, atol=5e-2, rtol=5e-2)

    # multi-K-step accumulator path (forced small tk to exercise the 3-D grid)
    K3, N3 = 256, 128
    x3 = jax.random.normal(kx3, (B, S, K3), dtype=jnp.float32)
    w3 = jax.random.normal(kw3, (N3, K3), dtype=jnp.float32) * 0.05
    b3 = jax.random.normal(kb3, (N3,), dtype=jnp.float32) * 0.1
    y3 = pallas_linear(x3, w3, b3, tk_max=128)
    jax.block_until_ready(y3)
    assert jnp.allclose(y3, x3 @ w3.T + b3, atol=5e-2, rtol=5e-2)

    # relu via the dispatcher (lane-dense tiled VPU elementwise kernel)
    relu_op = FunctionalOPTemplate("torch.nn.functional.relu")
    z = relu_op(y)
    jax.block_until_ready(z)
    assert jnp.allclose(z, jnp.maximum(y, 0.0))

    # relu on a ragged trailing dim (full-dim block, no flatten/pad pass)
    r = jax.random.normal(kb, (3, 5, 40), dtype=jnp.float32)
    zr = pallas_relu(r)
    jax.block_until_ready(zr)
    assert jnp.allclose(zr, jnp.maximum(r, 0.0))

    print("KERNEL_OK")
</pallas_src>

<mosaic_0001>
module attributes {stable_mosaic.version = 11 : i64} {
  func.func @_linear_onek_kernel(%arg0: i32, %arg1: i32, %arg2: memref<16x128xbf16, #tpu.memory_space<vmem>>, %arg3: memref<64x128xbf16, #tpu.memory_space<vmem>>, %arg4: memref<1x64xf32, #tpu.memory_space<vmem>>, %arg5: memref<16x64xf32, #tpu.memory_space<vmem>>) attributes {dimension_semantics = [#tpu.dimension_semantics<parallel>, #tpu.dimension_semantics<parallel>], iteration_bounds = array<i64: 1, 1>, scalar_prefetch = 0 : i64, scratch_operands = 0 : i64, tpu.core_type = #tpu.core_type<tc>, window_params = [{transform_indices = @transform_0, window_bounds = array<i64: 16, 128>}, {transform_indices = @transform_1, window_bounds = array<i64: 64, 128>}, {transform_indices = @transform_2, window_bounds = array<i64: 1, 64>}, {transform_indices = @transform_3, window_bounds = array<i64: 16, 64>}]} {
    %c0 = arith.constant 0 : index
    %c0_0 = arith.constant 0 : index
    %0 = vector.load %arg2[%c0, %c0_0] : memref<16x128xbf16, #tpu.memory_space<vmem>>, vector<16x128xbf16>
    %c0_1 = arith.constant 0 : index
    %c0_2 = arith.constant 0 : index
    %1 = vector.load %arg3[%c0_1, %c0_2] : memref<64x128xbf16, #tpu.memory_space<vmem>>, vector<64x128xbf16>
    %cst = arith.constant dense<0.000000e+00> : vector<16x64xf32>
    %2 = tpu.matmul %0, %1, %cst {dimension_numbers = #tpu.dot_dimension_numbers<[1], [1], [0], [0], [0, 0, 1, 0], [], []>} : vector<16x128xbf16>, vector<64x128xbf16>, vector<16x64xf32> -> vector<16x64xf32>
    %c0_3 = arith.constant 0 : index
    %c0_4 = arith.constant 0 : index
    %3 = vector.load %arg4[%c0_3, %c0_4] : memref<1x64xf32, #tpu.memory_space<vmem>>, vector<1x64xf32>
    %4 = vector.broadcast %3 : vector<1x64xf32> to vector<16x64xf32>
    %5 = arith.addf %2, %4 : vector<16x64xf32>
    %c0_5 = arith.constant 0 : index
    %c0_6 = arith.constant 0 : index
    %6 = vector.load %arg5[%c0_5, %c0_6] : memref<16x64xf32, #tpu.memory_space<vmem>>, vector<16x64xf32>
    tpu.vector_store %arg5[%c0_5, %c0_6], %5 {strides = array<i32>} : memref<16x64xf32, #tpu.memory_space<vmem>>, vector<16x64xf32>,
    return
  }
  func.func @transform_0(%arg0: i32, %arg1: i32) -> (i32, i32) {
    %c0_i32 = arith.constant 0 : i32
    %c0_i32_0 = arith.constant 0 : i32
    return %arg0, %c0_i32 : i32, i32
  }
  func.func @transform_1(%arg0: i32, %arg1: i32) -> (i32, i32) {
    %c0_i32 = arith.constant 0 : i32
    %c0_i32_0 = arith.constant 0 : i32
    return %arg1, %c0_i32 : i32, i32
  }
  func.func @transform_2(%arg0: i32, %arg1: i32) -> (i32, i32) {
    %c0_i32 = arith.constant 0 : i32
    %c0_i32_0 = arith.constant 0 : i32
    return %c0_i32, %arg1 : i32, i32
  }
  func.func @transform_3(%arg0: i32, %arg1: i32) -> (i32, i32) {
    %c0_i32 = arith.constant 0 : i32
    return %arg0, %arg1 : i32, i32
  }
}

</mosaic_0001>

<llo_original>
// kernel: tpu_custom_call.1
$region0: #{tpu_custom_call.1}
  #allocation0 [shape = 'u32[]', space=smem, size = 0x4, offset = 0x4, fixed_abs, tag = 'smem constant byte address 0x4 - core index']
  #allocation1 [shape = 'u32[72,128]{1,0:T(1,128)}', space=vmem, size = 0x9000, scoped, tag = 'internal scratch']
  %s0 = inlined_call_operand.hbm [shape: bf16[16,128], index: 0, kind: input, shape index: {}]
  %s1 = inlined_call_operand.hbm [shape: bf16[64,128], index: 1, kind: input, shape index: {}]
  %s2 = inlined_call_operand.vmem [shape: f32[1,64], index: 2, kind: input, shape index: {}]
  %s3 = inlined_call_operand.hbm [shape: f32[16,64], index: 3, kind: output, shape index: {}]
  %s4 = sld [smem:[#allocation0]]
  $region30: #{tpu_custom_call.1} parent=0
    _
  %s6 = ssub.s32 1, %s4
  %s7 = scalar_select 0, %s6, %s4
  $region1: #{tpu_custom_call.1} parent=0
    #allocation2 [shape = 'u8[4096]{0}', space=vmem, size = 0x1000, scoped, tag = 'input window, operand 0, single buffered']
    #allocation3 [shape = 's32[1]{0}', space=sflag, size = 0x4, scoped, tag = 'scoped memory for tpu_custom_call.1']
    #allocation4 [shape = 's32[1]{0}', space=sflag, size = 0x4, scoped, tag = 'scoped memory for tpu_custom_call.1']
    #allocation5 [shape = 'u8[16384]{0}', space=vmem, size = 0x4000, scoped, tag = 'input window, operand 1, single buffered']
    #allocation6 [shape = 's32[1]{0}', space=sflag, size = 0x4, scoped, tag = 'scoped memory for tpu_custom_call.1']
    #allocation7 [shape = 'u8[8192]{0}', space=vmem, size = 0x2000, scoped, tag = 'output window, operand 0, single buffered']
    %8 = vsyncpa [#allocation3], 0
    %9 = vsyncpa [#allocation6], 0
    %10 = vsyncpa [#allocation4], 0
    // Predicated region
    $region2: #{tpu_custom_call.1} parent=1 // pred_check
      _
    $region3: #{tpu_custom_call.1} parent=1 // pred_check_branch
      %12 = sbr.rel (0) target = $region5
    $region4: #{tpu_custom_call.1} parent=1 // pred_region
      %14 = vsyncadd [#allocation3], 0
      %s15 = sshll.u32 %s0, 4
      %s16 = int_to_ptr.hbm [resolvable:$true] %s15
      %s17 = sshll.u32 [#allocation2], 4
      %s18 = int_to_ptr.vmem [resolvable:$true] %s17
      %23 = dma.hbm_to_vmem [thread:$0]  %s16, 128, %s18, [#allocation3], 64, 64, 4
    $region5: #{tpu_custom_call.1} parent=1 // pred_fallthru
      _
    // Predicated region
    $region6: #{tpu_custom_call.1} parent=1 // pred_check
      _
    $region7: #{tpu_custom_call.1} parent=1 // pred_check_branch
      %25 = sbr.rel (0) target = $region9
    $region8: #{tpu_custom_call.1} parent=1 // pred_region
      %27 = vsyncadd [#allocation6], 0
      %s28 = sshll.u32 %s1, 4
      %s29 = int_to_ptr.hbm [resolvable:$true] %s28
      %s30 = sshll.u32 [#allocation5], 4
      %s31 = int_to_ptr.vmem [resolvable:$true] %s30
      %36 = dma.hbm_to_vmem [thread:$0]  %s29, 512, %s31, [#allocation6], 64, 64, 4
    $region9: #{tpu_custom_call.1} parent=1 // pred_fallthru
      _
    // Predicated region
    $region10: #{tpu_custom_call.1} parent=1 // pred_check
      _
    $region11: #{tpu_custom_call.1} parent=1 // pred_check_branch
      %38 = sbr.rel (0) target = $region13
    $region12: #{tpu_custom_call.1} parent=1 // pred_region
      _
    $region13: #{tpu_custom_call.1} parent=1 // pred_fallthru
      _
    // Predicated region
    $region14: #{tpu_custom_call.1} parent=1 // pred_check
      _
    $region15: #{tpu_custom_call.1} parent=1 // pred_check_branch
      %40 = sbr.rel (0) target = $region17
    $region16: #{tpu_custom_call.1} parent=1 // pred_region
      %42 = dma.done [#allocation3], 128
    $region17: #{tpu_custom_call.1} parent=1 // pred_fallthru
      _
    // Predicated region
    $region18: #{tpu_custom_call.1} parent=1 // pred_check
      _
    $region19: #{tpu_custom_call.1} parent=1 // pred_check_branch
      %44 = sbr.rel (0) target = $region21
    $region20: #{tpu_custom_call.1} parent=1 // pred_region
      %46 = dma.done [#allocation6], 512
    $region21: #{tpu_custom_call.1} parent=1 // pred_fallthru
      _
    %v48 = vld [vmem:[#allocation2] sm:$0xf]
    %v49 = vld [vmem:[#allocation2 + $0x4] sm:$0xf]
    %v50 = vld [vmem:[#allocation5] sm:$0xf]
    %v51 = vld [vmem:[#allocation5 + $0x4] sm:$0xf]
    %v52 = vld [vmem:[#allocation5 + $0x8] sm:$0xf]
    %v53 = vld [vmem:[#allocation5 + $0xc] sm:$0xf]
    %v54 = vld [vmem:[#allocation5 + $0x10] sm:$0xf]
    %v55 = vld [vmem:[#allocation5 + $0x14] sm:$0xf]
    %v56 = vld [vmem:[#allocation5 + $0x18] sm:$0xf]
    %v57 = vld [vmem:[#allocation5 + $0x1c] sm:$0xf]
    %v58 = vld [vmem:[%s2] sm:$0x1]
    %v60 = vperm.slane %v58, 0
    %v64 = vunpack.c.l.b16 %v48
    %v65 = vunpack.c.l.b16 %v49
    %v66 = vpack.c.b16 %v65, %v64
    %v76 = vunpack.c.l.b16 %v50
    %v77 = vunpack.c.l.b16 %v51
    %v78 = vunpack.c.l.b16 %v52
    %v79 = vunpack.c.l.b16 %v53
    %v80 = vunpack.c.l.b16 %v54
    %v81 = vunpack.c.l.b16 %v55
    %v82 = vunpack.c.l.b16 %v56
    %v83 = vunpack.c.l.b16 %v57
    %v84 = vpack.c.b16 %v77, %v76
    %v85 = vpack.c.b16 %v79, %v78
    %v86 = vpack.c.b16 %v81, %v80
    %v87 = vpack.c.b16 %v83, %v82
    %92 = vmatpush.bf16.xpose.msra.mxu0 0
    %93 = vmatpush.bf16.xpose.msra.mxu0 0
    %94 = vmatpush.bf16.xpose.msra.mxu0 0
    %95 = vmatpush.bf16.xpose.msra.mxu0 0
    %96 = vmatpush.bf16.xpose.msra.mxu0 %v87
    %97 = vmatpush.bf16.xpose.msra.mxu0 %v86
    %98 = vmatpush.bf16.xpose.msra.mxu0 %v85
    %99 = vmatpush.bf16.xpose.msra.mxu0 %v84
    %100 = vmatmul.bf16.gmra.mxu0 %v66
    %v101 = vpop.f32.mrf.mxu0
    %v102 = vadd.f32 %v60, %v101
    %v103 = vpop.f32.mrf.mxu0
    %v104 = vadd.f32 %v60, %v103
    %105 = vdwg.mxu0
    %vm106 = vcmask 523264
    %107 = vst.msk [vmem:[#allocation7] sm:$0xff] %vm106, %v102
    %108 = vst.msk [vmem:[#allocation7 + $0x8] sm:$0xff] %vm106, %v104
    // Predicated region
    $region22: #{tpu_custom_call.1} parent=1 // pred_check
      _
    $region23: #{tpu_custom_call.1} parent=1 // pred_check_branch
      %110 = sbr.rel (0) target = $region25
    $region24: #{tpu_custom_call.1} parent=1 // pred_region
      %112 = vsyncadd [#allocation4], 0
      %s113 = sshll.u32 [#allocation7], 4
      %s114 = int_to_ptr.vmem [resolvable:$true] %s113
      %s115 = sshll.u32 %s3, 4
      %s116 = int_to_ptr.hbm [resolvable:$true] %s115
      %121 = dma.vmem_to_hbm [thread:$0]  %s114, 256, %s116, [#allocation4], 128, 128, 8
    $region25: #{tpu_custom_call.1} parent=1 // pred_fallthru
      _
    // Predicated region
    $region26: #{tpu_custom_call.1} parent=1 // pred_check
      _
    $region27: #{tpu_custom_call.1} parent=1 // pred_check_branch
      %123 = sbr.rel (0) target = $region29
    $region28: #{tpu_custom_call.1} parent=1 // pred_region
      %125 = dma.done [#allocation4], 256
    $region29: #{tpu_custom_call.1} parent=1 // pred_fallthru
      _
    %126 = vsyncpa [#allocation3], 1
    %127 = vsyncpa [#allocation6], 1
    %128 = vsyncpa [#allocation4], 1

</llo_original>
